<compile_context>
chip_gen: v5e
topology: v5e:2x2
jax: 0.10.0
libtpu: 0.0.40
codegen_flags: <defaults>
</compile_context>

<pallas_src>
import functools

import jax
import jax.numpy as jnp
from jax.experimental import pallas as pl
from jax.experimental.pallas import tpu as pltpu


def _round_up(x, m):
    return ((x + m - 1) // m) * m


def _mdn_kernel(x_ref, w1_ref, b1_ref, w2_ref, b2_ref, out_ref, *, G, GD):
    """Fused 4-head MLP: one wide first-layer dot, one block-diagonal second dot,
    then per-lane-range activations (softmax / identity / exp / tanh)."""
    x = x_ref[...]

    # First layer: (tile, in) @ (in, 4*hidden) -> per-head hiddens concatenated.
    h = jnp.dot(x, w1_ref[...], preferred_element_type=jnp.float32) + b1_ref[...]
    h = jnp.maximum(h, 0.0)                                   # ReLU

    # Second layer: block-diagonal weights -> all head outputs, lane-padded to 128.
    z = jnp.dot(h, w2_ref[...], preferred_element_type=jnp.float32) + b2_ref[...]

    # Lane-index masks for the head sub-ranges of the padded output.
    col = jax.lax.broadcasted_iota(jnp.int32, z.shape, 1)
    pi_mask = col < G
    mu_mask = (col >= G) & (col < G + GD)
    sg_mask = (col >= G + GD) & (col < G + 2 * GD)
    rho_mask = (col >= G + 2 * GD) & (col < 2 * G + 2 * GD)

    # Softmax over the pi lanes only (max / sum restricted by mask).
    logits = jnp.where(pi_mask, z, -jnp.inf)
    m = jnp.max(logits, axis=-1, keepdims=True)

    # One full-width exp serves both the softmax numerator (shifted logits on the
    # pi lanes) and sigma = exp(z) on the sigma lanes.
    ez = jnp.exp(jnp.where(pi_mask, z - m, z))
    e = jnp.where(pi_mask, ez, 0.0)
    s = jnp.sum(e, axis=-1, keepdims=True)
    pi_vals = e * pl.reciprocal(s, approx=True)               # EUP divide

    out = jnp.where(pi_mask, pi_vals,
          jnp.where(mu_mask, z,
          jnp.where(sg_mask, ez,
          jnp.where(rho_mask, jnp.tanh(z), 0.0))))
    out_ref[...] = out


def _pack_params(params, input_dim, hidden, G, D):
    """Concatenate first-layer weights, build block-diagonal second-layer weights,
    pad the output dimension to a multiple of 128 lanes."""
    heads = ("pi", "mu", "std", "rho")
    out_dims = (G, G * D, G * D, G)
    total_out = sum(out_dims)                                 # 2G + 2GD
    out_pad = max(128, _round_up(total_out, 128))
    h4 = 4 * hidden

    w1 = jnp.concatenate([params[h][0] for h in heads], axis=1)   # (in, 4*hidden)
    b1 = jnp.concatenate([params[h][1] for h in heads], axis=1)   # (1, 4*hidden)

    w2 = jnp.zeros((h4, out_pad), jnp.float32)
    b2 = jnp.zeros((1, out_pad), jnp.float32)
    r_off = 0
    c_off = 0
    for h, od in zip(heads, out_dims):
        w2 = w2.at[r_off:r_off + hidden, c_off:c_off + od].set(params[h][2])
        b2 = b2.at[:, c_off:c_off + od].set(params[h][3])
        r_off += hidden
        c_off += od
    return w1, b1, w2, b2, total_out, out_pad


def mdn_forward(x, params, *, num_gaussians, output_dim, row_tile=256):
    """Pallas implementation of MDN.forward.

    x: (B, S, input_dim) float32
    params: dict with per-head (w1, b1, w2, b2), weights (in, out), biases (1, out)
    returns (pi, mu, sigma, rho, eos, duration) matching the PyTorch module.
    """
    B, S, input_dim = x.shape
    M = B * S
    G = num_gaussians
    D = output_dim
    GD = G * D
    hidden = params["pi"][0].shape[1]
    h4 = 4 * hidden

    w1p, b1p, w2p, b2p, total_out, out_pad = _pack_params(params, input_dim, hidden, G, D)

    # Row tiling: big tiles (amortize ~0.35us/step pipeline overhead), rounded-up
    # grid instead of a divisibility assert.  Sublane dim stays a multiple of 8.
    tile = min(row_tile, _round_up(M, 8))
    m_pad = _round_up(M, tile)
    grid = (m_pad // tile,)

    x2d = x.reshape(M, input_dim).astype(jnp.float32)
    if m_pad != M:
        x2d = jnp.pad(x2d, ((0, m_pad - M), (0, 0)))

    kernel = functools.partial(_mdn_kernel, G=G, GD=GD)

    cost = pl.CostEstimate(
        flops=2 * m_pad * (input_dim * h4 + h4 * out_pad),
        transcendentals=2 * m_pad * out_pad,
        bytes_accessed=4 * (m_pad * input_dim + input_dim * h4 + h4
                            + h4 * out_pad + out_pad + m_pad * out_pad),
    )

    out2d = pl.pallas_call(
        kernel,
        out_shape=jax.ShapeDtypeStruct((m_pad, out_pad), jnp.float32),
        grid_spec=pltpu.PrefetchScalarGridSpec(
            num_scalar_prefetch=0,
            grid=grid,
            in_specs=[
                pl.BlockSpec((tile, input_dim), lambda i: (i, 0)),   # x rows
                pl.BlockSpec((input_dim, h4), lambda i: (0, 0)),     # fused W1
                pl.BlockSpec((1, h4), lambda i: (0, 0)),             # fused b1
                pl.BlockSpec((h4, out_pad), lambda i: (0, 0)),       # block-diag W2
                pl.BlockSpec((1, out_pad), lambda i: (0, 0)),        # fused b2
            ],
            out_specs=pl.BlockSpec((tile, out_pad), lambda i: (i, 0)),
        ),
        compiler_params=pltpu.CompilerParams(
            dimension_semantics=("parallel",)),
        cost_estimate=cost,
    )(x2d, w1p, b1p, w2p, b2p)

    out2d = out2d[:M]
    pi = out2d[:, :G].reshape(B, S, G)
    mu = out2d[:, G:G + GD].reshape(B, S, G, D)
    sigma = out2d[:, G + GD:G + 2 * GD].reshape(B, S, G, D)
    rho = out2d[:, G + 2 * GD:2 * G + 2 * GD].reshape(B, S, G, 1)
    eos = 0
    duration = 0
    return pi, mu, sigma, rho, eos, duration


def init_mdn_params(key, input_dim, hidden, num_gaussians, output_dim):
    """Deterministic init mimicking PyTorch nn.Linear defaults (U(-1/sqrt(fan_in), +...)).
    mu head's last-layer bias is U(0,1) (torch.rand_like copy in __init__)."""
    params = {}
    head_out = {"pi": num_gaussians, "mu": output_dim * num_gaussians,
                "std": output_dim * num_gaussians, "rho": num_gaussians}
    for head, out_feats in head_out.items():
        key, k1, k2, k3, k4 = jax.random.split(key, 5)
        bound1 = 1.0 / jnp.sqrt(input_dim)
        bound2 = 1.0 / jnp.sqrt(hidden)
        w1 = jax.random.uniform(k1, (input_dim, hidden), jnp.float32, -bound1, bound1)
        b1 = jax.random.uniform(k2, (1, hidden), jnp.float32, -bound1, bound1)
        w2 = jax.random.uniform(k3, (hidden, out_feats), jnp.float32, -bound2, bound2)
        if head == "mu":
            b2 = jax.random.uniform(k4, (1, out_feats), jnp.float32, 0.0, 1.0)
        else:
            b2 = jax.random.uniform(k4, (1, out_feats), jnp.float32, -bound2, bound2)
        params[head] = (w1, b1, w2, b2)
    return params


def _reference_forward(x, params, num_gaussians, output_dim):
    """Plain-JAX reference for sanity checking."""
    B, S, _ = x.shape

    def mlp(p):
        w1, b1, w2, b2 = p
        h = jnp.maximum(x @ w1 + b1[0], 0.0)
        return h @ w2 + b2[0]

    pi = jax.nn.softmax(mlp(params["pi"]), axis=-1)
    mu = mlp(params["mu"]).reshape(B, S, num_gaussians, output_dim)
    sigma = jnp.exp(mlp(params["std"])).reshape(B, S, num_gaussians, output_dim)
    rho = jnp.tanh(mlp(params["rho"])).reshape(B, S, num_gaussians, 1)
    return pi, mu, sigma, rho


if __name__ == "__main__":
    # Small shapes consistent with the module: x is (batch, seq, input_dim).
    B, S = 2, 8
    input_dim = 32
    hidden = 32          # cfg.MDN_hidden_num
    num_gaussians = 4
    output_dim = 2       # (y, x)

    key = jax.random.PRNGKey(0)
    kx, kp = jax.random.split(key)
    x = jax.random.normal(kx, (B, S, input_dim), dtype=jnp.float32)
    params = init_mdn_params(kp, input_dim, hidden, num_gaussians, output_dim)

    fwd = jax.jit(functools.partial(mdn_forward,
                                    num_gaussians=num_gaussians,
                                    output_dim=output_dim))
    pi, mu, sigma, rho, eos, duration = fwd(x, params)
    jax.block_until_ready((pi, mu, sigma, rho))

    # Correctness check against a plain-JAX reference.
    rpi, rmu, rsigma, rrho = _reference_forward(x, params, num_gaussians, output_dim)
    assert pi.shape == (B, S, num_gaussians)
    assert mu.shape == (B, S, num_gaussians, output_dim)
    assert sigma.shape == (B, S, num_gaussians, output_dim)
    assert rho.shape == (B, S, num_gaussians, 1)
    assert eos == 0 and duration == 0
    # pi uses the approximate (EUP) reciprocal for the softmax denominator, so it
    # gets a slightly looser tolerance; everything else matches to f32 accuracy.
    checks = ((pi, rpi, 2e-3), (mu, rmu, 1e-4), (sigma, rsigma, 1e-3), (rho, rrho, 1e-4))
    for a, b, tol in checks:
        assert jnp.max(jnp.abs(a - b)) < tol

    # TODO(synk): sampling methods (sample_mdn*, Categorical/MultivariateNormal)
    # and the gaussian/mixture-probability helpers are host-side / non-forward
    # logic and are not part of this kernel.
    print("KERNEL_OK")
</pallas_src>

<mosaic_0001>
module attributes {stable_mosaic.version = 11 : i64} {
  func.func @_mdn_kernel(%arg0: i32, %arg1: memref<16x32xf32, #tpu.memory_space<vmem>>, %arg2: memref<32x128xf32, #tpu.memory_space<vmem>>, %arg3: memref<1x128xf32, #tpu.memory_space<vmem>>, %arg4: memref<128x128xf32, #tpu.memory_space<vmem>>, %arg5: memref<1x128xf32, #tpu.memory_space<vmem>>, %arg6: memref<16x128xf32, #tpu.memory_space<vmem>>) attributes {dimension_semantics = [#tpu.dimension_semantics<parallel>], iteration_bounds = array<i64: 1>, scalar_prefetch = 0 : i64, scratch_operands = 0 : i64, tpu.core_type = #tpu.core_type<tc>, window_params = [{transform_indices = @transform_0, window_bounds = array<i64: 16, 32>}, {pipeline_mode = #tpu.pipeline_mode<synchronous>, transform_indices = @transform_1, window_bounds = array<i64: 32, 128>}, {pipeline_mode = #tpu.pipeline_mode<synchronous>, transform_indices = @transform_2, window_bounds = array<i64: 1, 128>}, {pipeline_mode = #tpu.pipeline_mode<synchronous>, transform_indices = @transform_3, window_bounds = array<i64: 128, 128>}, {pipeline_mode = #tpu.pipeline_mode<synchronous>, transform_indices = @transform_4, window_bounds = array<i64: 1, 128>}, {transform_indices = @transform_5, window_bounds = array<i64: 16, 128>}]} {
    %c0 = arith.constant 0 : index
    %c0_0 = arith.constant 0 : index
    %0 = vector.load %arg1[%c0, %c0_0] : memref<16x32xf32, #tpu.memory_space<vmem>>, vector<16x32xf32>
    %c0_1 = arith.constant 0 : index
    %c0_2 = arith.constant 0 : index
    %1 = vector.load %arg2[%c0_1, %c0_2] : memref<32x128xf32, #tpu.memory_space<vmem>>, vector<32x128xf32>
    %cst = arith.constant dense<0.000000e+00> : vector<16x128xf32>
    %2 = tpu.matmul %0, %1, %cst {dimension_numbers = #tpu.dot_dimension_numbers<[1], [0], [0], [1], [0, 0, 1, 1], [], []>} : vector<16x32xf32>, vector<32x128xf32>, vector<16x128xf32> -> vector<16x128xf32>
    %c0_3 = arith.constant 0 : index
    %c0_4 = arith.constant 0 : index
    %3 = vector.load %arg3[%c0_3, %c0_4] : memref<1x128xf32, #tpu.memory_space<vmem>>, vector<1x128xf32>
    %4 = vector.broadcast %3 : vector<1x128xf32> to vector<16x128xf32>
    %5 = arith.addf %2, %4 : vector<16x128xf32>
    %cst_5 = arith.constant 0.000000e+00 : f32
    %6 = vector.broadcast %cst_5 : f32 to vector<16x128xf32>
    %7 = arith.maximumf %5, %6 : vector<16x128xf32>
    %c0_6 = arith.constant 0 : index
    %c0_7 = arith.constant 0 : index
    %8 = vector.load %arg4[%c0_6, %c0_7] : memref<128x128xf32, #tpu.memory_space<vmem>>, vector<128x128xf32>
    %cst_8 = arith.constant dense<0.000000e+00> : vector<16x128xf32>
    %9 = tpu.matmul %7, %8, %cst_8 {dimension_numbers = #tpu.dot_dimension_numbers<[1], [0], [0], [1], [0, 0, 1, 1], [], []>} : vector<16x128xf32>, vector<128x128xf32>, vector<16x128xf32> -> vector<16x128xf32>
    %c0_9 = arith.constant 0 : index
    %c0_10 = arith.constant 0 : index
    %10 = vector.load %arg5[%c0_9, %c0_10] : memref<1x128xf32, #tpu.memory_space<vmem>>, vector<1x128xf32>
    %11 = vector.broadcast %10 : vector<1x128xf32> to vector<16x128xf32>
    %12 = arith.addf %9, %11 : vector<16x128xf32>
    %13 = tpu.iota {dimensions = array<i32: 1>} : vector<16x128xi32>
    %c4_i32 = arith.constant 4 : i32
    %14 = vector.broadcast %c4_i32 : i32 to vector<16x128xi32>
    %15 = arith.cmpi slt, %13, %14 : vector<16x128xi32>
    %c4_i32_11 = arith.constant 4 : i32
    %16 = vector.broadcast %c4_i32_11 : i32 to vector<16x128xi32>
    %17 = arith.cmpi sge, %13, %16 : vector<16x128xi32>
    %c12_i32 = arith.constant 12 : i32
    %18 = vector.broadcast %c12_i32 : i32 to vector<16x128xi32>
    %19 = arith.cmpi slt, %13, %18 : vector<16x128xi32>
    %20 = arith.andi %17, %19 : vector<16x128xi1>
    %c12_i32_12 = arith.constant 12 : i32
    %21 = vector.broadcast %c12_i32_12 : i32 to vector<16x128xi32>
    %22 = arith.cmpi sge, %13, %21 : vector<16x128xi32>
    %c20_i32 = arith.constant 20 : i32
    %23 = vector.broadcast %c20_i32 : i32 to vector<16x128xi32>
    %24 = arith.cmpi slt, %13, %23 : vector<16x128xi32>
    %25 = arith.andi %22, %24 : vector<16x128xi1>
    %c20_i32_13 = arith.constant 20 : i32
    %26 = vector.broadcast %c20_i32_13 : i32 to vector<16x128xi32>
    %27 = arith.cmpi sge, %13, %26 : vector<16x128xi32>
    %c24_i32 = arith.constant 24 : i32
    %28 = vector.broadcast %c24_i32 : i32 to vector<16x128xi32>
    %29 = arith.cmpi slt, %13, %28 : vector<16x128xi32>
    %30 = arith.andi %27, %29 : vector<16x128xi1>
    %cst_14 = arith.constant 0xFF800000 : f32
    %31 = vector.broadcast %cst_14 : f32 to vector<16x128xf32>
    %32 = arith.select %15, %12, %31 : vector<16x128xi1>, vector<16x128xf32>
    %cst_15 = arith.constant dense<0xFF800000> : vector<16xf32>
    %33 = vector.multi_reduction <maximumf>, %32, %cst_15 [1] : vector<16x128xf32> to vector<16xf32>
    %34 = vector.shape_cast %33 : vector<16xf32> to vector<16x1xf32>
    %35 = vector.broadcast %34 : vector<16x1xf32> to vector<16x128xf32>
    %36 = arith.subf %12, %35 : vector<16x128xf32>
    %37 = arith.select %15, %36, %12 : vector<16x128xi1>, vector<16x128xf32>
    %38 = math.exp %37 : vector<16x128xf32>
    %cst_16 = arith.constant 0.000000e+00 : f32
    %39 = vector.broadcast %cst_16 : f32 to vector<16x128xf32>
    %40 = arith.select %15, %38, %39 : vector<16x128xi1>, vector<16x128xf32>
    %cst_17 = arith.constant dense<0.000000e+00> : vector<16xf32>
    %41 = vector.multi_reduction <add>, %40, %cst_17 [1] : vector<16x128xf32> to vector<16xf32>
    %42 = vector.shape_cast %41 : vector<16xf32> to vector<16x1xf32>
    %43 = tpu.reciprocal %42 {approx = true} : vector<16x1xf32> -> vector<16x1xf32>
    %44 = vector.broadcast %43 : vector<16x1xf32> to vector<16x128xf32>
    %45 = arith.mulf %40, %44 : vector<16x128xf32>
    %46 = math.tanh %12 : vector<16x128xf32>
    %cst_18 = arith.constant 0.000000e+00 : f32
    %47 = vector.broadcast %cst_18 : f32 to vector<16x128xf32>
    %48 = arith.select %30, %46, %47 : vector<16x128xi1>, vector<16x128xf32>
    %49 = arith.select %25, %38, %48 : vector<16x128xi1>, vector<16x128xf32>
    %50 = arith.select %20, %12, %49 : vector<16x128xi1>, vector<16x128xf32>
    %51 = arith.select %15, %45, %50 : vector<16x128xi1>, vector<16x128xf32>
    %c0_19 = arith.constant 0 : index
    %c0_20 = arith.constant 0 : index
    %52 = vector.load %arg6[%c0_19, %c0_20] : memref<16x128xf32, #tpu.memory_space<vmem>>, vector<16x128xf32>
    tpu.vector_store %arg6[%c0_19, %c0_20], %51 {strides = array<i32>} : memref<16x128xf32, #tpu.memory_space<vmem>>, vector<16x128xf32>,
    return
  }
  func.func @transform_0(%arg0: i32) -> (i32, i32) {
    %c0_i32 = arith.constant 0 : i32
    %c0_i32_0 = arith.constant 0 : i32
    return %arg0, %c0_i32 : i32, i32
  }
  func.func @transform_1(%arg0: i32) -> (i32, i32) {
    %c0_i32 = arith.constant 0 : i32
    %c0_i32_0 = arith.constant 0 : i32
    %c0_i32_1 = arith.constant 0 : i32
    return %c0_i32, %c0_i32_0 : i32, i32
  }
  func.func @transform_2(%arg0: i32) -> (i32, i32) {
    %c0_i32 = arith.constant 0 : i32
    %c0_i32_0 = arith.constant 0 : i32
    %c0_i32_1 = arith.constant 0 : i32
    return %c0_i32, %c0_i32_0 : i32, i32
  }
  func.func @transform_3(%arg0: i32) -> (i32, i32) {
    %c0_i32 = arith.constant 0 : i32
    %c0_i32_0 = arith.constant 0 : i32
    %c0_i32_1 = arith.constant 0 : i32
    return %c0_i32, %c0_i32_0 : i32, i32
  }
  func.func @transform_4(%arg0: i32) -> (i32, i32) {
    %c0_i32 = arith.constant 0 : i32
    %c0_i32_0 = arith.constant 0 : i32
    %c0_i32_1 = arith.constant 0 : i32
    return %c0_i32, %c0_i32_0 : i32, i32
  }
  func.func @transform_5(%arg0: i32) -> (i32, i32) {
    %c0_i32 = arith.constant 0 : i32
    %c0_i32_0 = arith.constant 0 : i32
    return %arg0, %c0_i32 : i32, i32
  }
}

</mosaic_0001>

<llo_original>
// kernel: mdn_forward.1
$region0: #{mdn_forward.1}
  #allocation0 [shape = 'u32[]', space=smem, size = 0x4, offset = 0x4, fixed_abs, tag = 'smem constant byte address 0x4 - core index']
  #allocation1 [shape = 'u32[72,128]{1,0:T(1,128)}', space=vmem, size = 0x9000, scoped, tag = 'internal scratch']
  %s0 = inlined_call_operand.vmem [shape: f32[16,32], index: 0, kind: input, shape index: {}]
  %s1 = inlined_call_operand.vmem [shape: f32[32,128], index: 1, kind: input, shape index: {}]
  %s2 = inlined_call_operand.vmem [shape: f32[1,128], index: 2, kind: input, shape index: {}]
  %s3 = inlined_call_operand.vmem [shape: f32[128,128], index: 3, kind: input, shape index: {}]
  %s4 = inlined_call_operand.vmem [shape: f32[1,128], index: 4, kind: input, shape index: {}]
  %s5 = inlined_call_operand.vmem [shape: f32[16,128], index: 5, kind: output, shape index: {}]
  %s6 = sld [smem:[#allocation0]]
  $region30: #{mdn_forward.1} parent=0
    _
  %s8 = ssub.s32 1, %s6
  %s9 = scalar_select 0, %s8, %s6
  // Predicated region
  $region2: #{mdn_forward.1} parent=0 // pred_check
    _
  $region3: #{mdn_forward.1} parent=0 // pred_check_branch
    %11 = sbr.rel (0) target = $region5
  $region4: #{mdn_forward.1} parent=0 // pred_region
    _
  $region5: #{mdn_forward.1} parent=0 // pred_fallthru
    _
  // Predicated region
  $region6: #{mdn_forward.1} parent=0 // pred_check
    _
  $region7: #{mdn_forward.1} parent=0 // pred_check_branch
    %13 = sbr.rel (0) target = $region9
  $region8: #{mdn_forward.1} parent=0 // pred_region
    _
  $region9: #{mdn_forward.1} parent=0 // pred_fallthru
    _
  // Predicated region
  $region10: #{mdn_forward.1} parent=0 // pred_check
    _
  $region11: #{mdn_forward.1} parent=0 // pred_check_branch
    %15 = sbr.rel (0) target = $region13
  $region12: #{mdn_forward.1} parent=0 // pred_region
    _
  $region13: #{mdn_forward.1} parent=0 // pred_fallthru
    _
  // Predicated region
  $region14: #{mdn_forward.1} parent=0 // pred_check
    _
  $region15: #{mdn_forward.1} parent=0 // pred_check_branch
    %17 = sbr.rel (0) target = $region17
  $region16: #{mdn_forward.1} parent=0 // pred_region
    _
  $region17: #{mdn_forward.1} parent=0 // pred_fallthru
    _
  // Predicated region
  $region18: #{mdn_forward.1} parent=0 // pred_check
    _
  $region19: #{mdn_forward.1} parent=0 // pred_check_branch
    %19 = sbr.rel (0) target = $region21
  $region20: #{mdn_forward.1} parent=0 // pred_region
    _
  $region21: #{mdn_forward.1} parent=0 // pred_fallthru
    _
  %v20 = vld [vmem:[%s0] sm:$0xff]
  %v21 = vld [vmem:[%s0 + $0x8] sm:$0xff]
  %v22 = vld [vmem:[%s1] sm:$0xff]
  %v23 = vld [vmem:[%s1 + $0x8] sm:$0xff]
  %v24 = vld [vmem:[%s1 + $0x10] sm:$0xff]
  %v25 = vld [vmem:[%s1 + $0x18] sm:$0xff]
  %v26 = vld [vmem:[%s2] sm:$0x1]
  %v28 = vperm.slane %v26, 0
  %vm30 = vcmask 261120
  %v32 = vsel %vm30, %v20, 0
  %v35 = vsel %vm30, %v21, 0
  %37 = vmatpush.msra.mxu0 0.0
  %38 = vmatpush.msra.mxu0 0.0
  %39 = vmatpush.msra.mxu0 0.0
  %40 = vmatpush.msra.mxu0 0.0
  %41 = vmatpush.msra.mxu0 0.0
  %42 = vmatpush.msra.mxu0 0.0
  %43 = vmatpush.msra.mxu0 0.0
  %44 = vmatpush.msra.mxu0 0.0
  %45 = vmatpush.msra.mxu0 0.0
  %46 = vmatpush.msra.mxu0 0.0
  %47 = vmatpush.msra.mxu0 0.0
  %48 = vmatpush.msra.mxu0 0.0
  %49 = vmatpush.msra.mxu0 %v25
  %50 = vmatpush.msra.mxu0 %v24
  %51 = vmatpush.msra.mxu0 %v23
  %52 = vmatpush.msra.mxu0 %v22
  %53 = vmatmul.f32.gmra.mxu0 %v32
  %v54 = vpop.f32.mrf.mxu0
  %v55 = vadd.f32 %v28, %v54
  %56 = vmatmul.f32.gmra.mxu0 %v35
  %v57 = vpop.f32.mrf.mxu0
  %v58 = vadd.f32 %v28, %v57
  %59 = vdwg.mxu0
  %v60 = vmax.f32 %v55, 0.0
  %v61 = vmax.f32 %v58, 0.0
  %v62 = vld [vmem:[%s3] sm:$0xff]
  %v63 = vld [vmem:[%s3 + $0x8] sm:$0xff]
  %v64 = vld [vmem:[%s3 + $0x10] sm:$0xff]
  %v65 = vld [vmem:[%s3 + $0x18] sm:$0xff]
  %v66 = vld [vmem:[%s3 + $0x20] sm:$0xff]
  %v67 = vld [vmem:[%s3 + $0x28] sm:$0xff]
  %v68 = vld [vmem:[%s3 + $0x30] sm:$0xff]
  %v69 = vld [vmem:[%s3 + $0x38] sm:$0xff]
  %v70 = vld [vmem:[%s3 + $0x40] sm:$0xff]
  %v71 = vld [vmem:[%s3 + $0x48] sm:$0xff]
  %v72 = vld [vmem:[%s3 + $0x50] sm:$0xff]
  %v73 = vld [vmem:[%s3 + $0x58] sm:$0xff]
  %v74 = vld [vmem:[%s3 + $0x60] sm:$0xff]
  %v75 = vld [vmem:[%s3 + $0x68] sm:$0xff]
  %v76 = vld [vmem:[%s3 + $0x70] sm:$0xff]
  %v77 = vld [vmem:[%s3 + $0x78] sm:$0xff]
  %v78 = vld [vmem:[%s4] sm:$0x1]
  %v80 = vperm.slane %v78, 0
  %82 = vmatpush.msra.mxu0 %v77
  %83 = vmatpush.msra.mxu0 %v76
  %84 = vmatpush.msra.mxu0 %v75
  %85 = vmatpush.msra.mxu0 %v74
  %86 = vmatpush.msra.mxu0 %v73
  %87 = vmatpush.msra.mxu0 %v72
  %88 = vmatpush.msra.mxu0 %v71
  %89 = vmatpush.msra.mxu0 %v70
  %90 = vmatpush.msra.mxu0 %v69
  %91 = vmatpush.msra.mxu0 %v68
  %92 = vmatpush.msra.mxu0 %v67
  %93 = vmatpush.msra.mxu0 %v66
  %94 = vmatpush.msra.mxu0 %v65
  %95 = vmatpush.msra.mxu0 %v64
  %96 = vmatpush.msra.mxu0 %v63
  %97 = vmatpush.msra.mxu0 %v62
  %98 = vmatmul.f32.gmra.mxu0 %v60
  %v99 = vpop.f32.mrf.mxu0
  %v100 = vadd.f32 %v80, %v99
  %101 = vmatmul.f32.gmra.mxu0 %v61
  %v102 = vpop.f32.mrf.mxu0
  %v103 = vadd.f32 %v80, %v102
  %104 = vdwg.mxu0
  %v105 = vlaneseq
  %v106 = vand.u32 %v105, 127
  %vm107 = vcmp.lt.s32.totalorder %v106, 4
  %vm108 = vcmp.ge.s32.totalorder %v106, 4
  %vm109 = vcmp.lt.s32.totalorder %v106, 12
  %vm110 = vmand %vm108, %vm109
  %vm111 = vcmp.ge.s32.totalorder %v106, 12
  %vm112 = vcmp.lt.s32.totalorder %v106, 20
  %vm113 = vmand %vm111, %vm112
  %vm114 = vcmp.ge.s32.totalorder %v106, 20
  %vm115 = vcmp.lt.s32.totalorder %v106, 24
  %vm116 = vmand %vm114, %vm115
  %v117 = vsel %vm107, %v100, -inf
  %v118 = vsel %vm107, %v103, -inf
  %119 = vmax.xlane.f32.xlu0 %v117
  %v120 = vpop.xlane.xlu0 %119
  %121 = vmax.xlane.f32.xlu0 %v118
  %v122 = vpop.xlane.xlu0 %121
  %v123 = vsub.f32 %v100, %v120
  %v124 = vsub.f32 %v103, %v122
  %v125 = vsel %vm107, %v123, %v100
  %v126 = vsel %vm107, %v124, %v103
  %v127 = vmul.f32 %v125, 1.442695
  %v128 = vpow.pop %v127
  %v129 = vmul.f32 %v126, 1.442695
  %v130 = vpow.pop %v129
  %v131 = vsel %vm107, %v128, 0.0
  %v132 = vsel %vm107, %v130, 0.0
  %133 = vadd.xlane.f32.xlu0 %v131
  %v134 = vpop.xlane.xlu0 %133
  %135 = vadd.xlane.f32.xlu0 %v132
  %v136 = vpop.xlane.xlu0 %135
  %v137 = vrcp.pop %v134
  %v138 = vrcp.pop %v136
  %v139 = vmul.f32 %v131, %v137
  %v140 = vmul.f32 %v132, %v138
  %v141 = vtanh.pop %v100
  %v142 = vtanh.pop %v103
  %v143 = vsel %vm116, %v141, 0.0
  %v144 = vsel %vm116, %v142, 0.0
  %v145 = vsel %vm113, %v128, %v143
  %v146 = vsel %vm113, %v130, %v144
  %v147 = vsel %vm110, %v100, %v145
  %v148 = vsel %vm110, %v103, %v146
  %v149 = vsel %vm107, %v139, %v147
  %v150 = vsel %vm107, %v140, %v148
  %151 = vst [vmem:[%s5] sm:$0xff] %v149
  %152 = vst [vmem:[%s5 + $0x8] sm:$0xff] %v150
  // Predicated region
  $region22: #{mdn_forward.1} parent=0 // pred_check
    _
  $region23: #{mdn_forward.1} parent=0 // pred_check_branch
    %154 = sbr.rel (0) target = $region25
  $region24: #{mdn_forward.1} parent=0 // pred_region
    _
  $region25: #{mdn_forward.1} parent=0 // pred_fallthru
    _
  // Predicated region
  $region26: #{mdn_forward.1} parent=0 // pred_check
    _
  $region27: #{mdn_forward.1} parent=0 // pred_check_branch
    %156 = sbr.rel (0) target = $region29
  $region28: #{mdn_forward.1} parent=0 // pred_region
    _
  $region29: #{mdn_forward.1} parent=0 // pred_fallthru
    _

</llo_original>
